<compile_context>
chip_gen: v7x
topology: tpu7x:2x2x1
jax: 0.10.0
libtpu: 0.0.40
codegen_flags: <defaults>
</compile_context>

<pallas_src>
import math

import jax
import jax.numpy as jnp
from jax.experimental import pallas as pl
from jax.experimental.pallas import tpu as pltpu


def memc_loupe_kernel(sc_ref, cw_ref, cb_ref, wr_ref, wi_ref, th_ref, o_ref,
                      prob_buf, sum_ref):
    ph = pl.program_id(0)   # 0: conv+sigmoid+sum, 1: rescale+final sigmoid
    t = pl.program_id(1)    # H-tile index

    # ---------------- phase 0: 1x1 conv (slope folded) + sigmoid + sum -----
    @pl.when(ph == 0)
    def _phase0():
        @pl.when(t == 0)
        def _init():
            sum_ref[...] = jnp.zeros_like(sum_ref)

        slope = sc_ref[0]
        wr0 = wr_ref[0]          # (TH, W)
        wr1 = wr_ref[1]
        wi0 = wi_ref[0]
        wi1 = wi_ref[1]

        psum = jnp.zeros((1, 1), jnp.float32)
        for o in range(2):       # per-channel, end-to-end (no stacking)
            z = (slope * cb_ref[o]
                 + (slope * cw_ref[o, 0]) * wr0
                 + (slope * cw_ref[o, 1]) * wr1
                 + (slope * cw_ref[o, 2]) * wi0
                 + (slope * cw_ref[o, 3]) * wi1)
            p = jax.nn.sigmoid(z)                     # (TH, W)
            prob_buf[2 * t + o] = p                   # resident VMEM scratch
            psum = psum + jnp.sum(p, keepdims=True)   # (1, 1)
        sum_ref[...] = sum_ref[...] + psum

    # ---------------- phase 1: scalar rescale + soft binarization ----------
    @pl.when(ph == 1)
    def _phase1():
        sample_slope = sc_ref[1]
        sparsity = sc_ref[2]

        inv_n = 1.0 / float(math.prod(prob_buf.shape))   # 1 / (2*H*W), static
        xbar = sum_ref[...] * inv_n                       # (1, 1)
        r = sparsity / xbar
        beta = (1.0 - sparsity) / (1.0 - xbar)
        cond = r <= 1.0
        a = jnp.where(cond, r, beta)                      # (1, 1)
        b = jnp.where(cond, jnp.zeros_like(r), 1.0 - beta)

        for o in range(2):
            p = prob_buf[2 * t + o]                       # (TH, W)
            q = a * p + b                                 # single FMA / pixel
            o_ref[o] = jax.nn.sigmoid(sample_slope * (q - th_ref[o]))


def _pick_tile_h(h):
    # Prefer >= 2 tiles so the phase-0 pipeline can overlap DMA with compute;
    # TH is always a multiple of 8 (sublane constraint) or the full H.
    for th in (128, 64, 32, 16, 8):
        if h % th == 0 and h // th >= 2:
            return th
    return h


@jax.jit
def memc_loupe_forward(mask, add_weight_real, add_weight_imag, conv_w, conv_b,
                       thresh, slope, sample_slope, sparsity):
    B, C, H, W = mask.shape
    # `mask` (the kspace tensor) is only multiplied by zero in the reference;
    # for finite kspace it contributes nothing, so it is not read at all.
    del mask

    wr = add_weight_real.reshape(2, H, W).astype(jnp.float32)
    wi = add_weight_imag.reshape(2, H, W).astype(jnp.float32)
    th = thresh.reshape(2, H, W).astype(jnp.float32)
    scalars = jnp.array([slope, sample_slope, sparsity], dtype=jnp.float32)
    cw = conv_w.astype(jnp.float32)
    cb = conv_b.astype(jnp.float32)

    TH = _pick_tile_h(H)
    nt = H // TH

    smem_spec = pl.BlockSpec(memory_space=pltpu.MemorySpace.SMEM)
    # phase 0: block t ; phase 1: stay parked on the last block (no refetch).
    wrwi_spec = pl.BlockSpec((2, TH, W),
                             lambda ph, t: (0, t * (1 - ph) + (nt - 1) * ph, 0))
    # phase 0: stay on block 0 ; phase 1: block t.
    th_spec = pl.BlockSpec((2, TH, W), lambda ph, t: (0, t * ph, 0))
    out_spec = pl.BlockSpec((2, TH, W), lambda ph, t: (0, t * ph, 0))

    grid_spec = pltpu.PrefetchScalarGridSpec(
        num_scalar_prefetch=0,
        grid=(2, nt),
        in_specs=[smem_spec, smem_spec, smem_spec, wrwi_spec, wrwi_spec,
                  th_spec],
        out_specs=out_spec,
        scratch_shapes=[
            pltpu.VMEM((2 * nt, TH, W), jnp.float32),   # prob, resident
            pltpu.VMEM((1, 1), jnp.float32),            # running global sum
        ],
    )

    out = pl.pallas_call(
        memc_loupe_kernel,
        out_shape=jax.ShapeDtypeStruct((2, H, W), jnp.float32),
        grid_spec=grid_spec,
        compiler_params=pltpu.CompilerParams(
            # Both axes are sequential: phase 1 needs the phase-0 global sum.
            # TODO(synk): on v7x, split phase 0 across the two TensorCores
            # with a cross-core partial-sum reduction.
            dimension_semantics=("arbitrary", "arbitrary")),
    )(scalars, cw, cb, wr, wi, th)

    # prob_mask_tensor shape in the reference code: (1, 2, H, W)
    return out.reshape(1, 2, H, W)


def _reference_forward(add_weight_real, add_weight_imag, conv_w, conv_b,
                       thresh, slope, sample_slope, sparsity, H, W):
    """Pure-JAX re-implementation of the PyTorch math (option=True)."""
    chans = jnp.concatenate([add_weight_real.reshape(2, H, W),
                             add_weight_imag.reshape(2, H, W)], axis=0)
    x = jnp.einsum('oc,chw->ohw', conv_w, chans) + conv_b[:, None, None]
    p = jax.nn.sigmoid(slope * x)
    xbar = jnp.mean(p)
    r = sparsity / xbar
    beta = (1.0 - sparsity) / (1.0 - xbar)
    p = jnp.where(r <= 1.0, p * r, 1.0 - (1.0 - p) * beta)
    out = jax.nn.sigmoid(sample_slope * (p - thresh.reshape(2, H, W)))
    return out.reshape(1, 2, H, W)


if __name__ == "__main__":
    key = jax.random.PRNGKey(0)
    k_mask, k_wr, k_wi, k_cw, k_cb, k_th = jax.random.split(key, 6)

    # Small stand-in for the real (2, 4, 256, 256); W kept lane-dense (128).
    B, C, H, W = 2, 4, 16, 128
    slope = 5.0
    sample_slope = 10.0
    sparsity = 0.25
    input_shape = (1, 2, H, W)     # add_weight_{real,imag} parameter shape

    # Deterministic parameter init mirroring the torch __init__:
    #   add_weight = -log(1/u - 1) / slope,  u ~ U(0, 1)
    eps = 1e-4
    u_r = jax.random.uniform(k_wr, input_shape, jnp.float32, eps, 1.0 - eps)
    u_i = jax.random.uniform(k_wi, input_shape, jnp.float32, eps, 1.0 - eps)
    add_weight_real = -jnp.log(1.0 / u_r - 1.0) / slope
    add_weight_imag = -jnp.log(1.0 / u_i - 1.0) / slope

    # nn.Conv2d(4, 2, 1) parameters (deterministic uniform in kaiming range)
    bound = 1.0 / jnp.sqrt(4.0)
    conv_w = jax.random.uniform(k_cw, (2, 4), jnp.float32, -bound, bound)
    conv_b = jax.random.uniform(k_cb, (2,), jnp.float32, -bound, bound)

    # Random thresholds (torch.rand at runtime) -> precomputed deterministically.
    thresh = jax.random.uniform(k_th, (1, 2, H, W), jnp.float32)

    mask = jax.random.normal(k_mask, (B, C, H, W), jnp.float32)

    dcmask = memc_loupe_forward(mask, add_weight_real, add_weight_imag,
                                conv_w, conv_b, thresh,
                                slope, sample_slope, sparsity)
    jax.block_until_ready(dcmask)

    assert dcmask.shape == (1, 2, H, W)
    assert bool(jnp.all(jnp.isfinite(dcmask)))

    ref = _reference_forward(add_weight_real, add_weight_imag, conv_w, conv_b,
                             thresh, slope, sample_slope, sparsity, H, W)
    assert bool(jnp.allclose(dcmask, ref, atol=1e-3, rtol=1e-3)), (
        float(jnp.max(jnp.abs(dcmask - ref))))

    print("KERNEL_OK")
</pallas_src>

<mosaic_0001>
module attributes {stable_mosaic.version = 11 : i64} {
  func.func @memc_loupe_kernel(%arg0: i32, %arg1: i32, %arg2: memref<3xf32, #tpu.memory_space<smem>>, %arg3: memref<2x4xf32, #tpu.memory_space<smem>>, %arg4: memref<2xf32, #tpu.memory_space<smem>>, %arg5: memref<2x8x128xf32, #tpu.memory_space<vmem>>, %arg6: memref<2x8x128xf32, #tpu.memory_space<vmem>>, %arg7: memref<2x8x128xf32, #tpu.memory_space<vmem>>, %arg8: memref<2x8x128xf32, #tpu.memory_space<vmem>>, %arg9: memref<4x8x128xf32, #tpu.memory_space<vmem>>, %arg10: memref<1x1xf32, #tpu.memory_space<vmem>>) attributes {dimension_semantics = [#tpu.dimension_semantics<arbitrary>, #tpu.dimension_semantics<arbitrary>], iteration_bounds = array<i64: 2, 2>, scalar_prefetch = 0 : i64, scratch_operands = 2 : i64, tpu.core_type = #tpu.core_type<tc>, window_params = [{transform_indices = @transform_0, window_bounds = array<i64: 3>}, {transform_indices = @transform_1, window_bounds = array<i64: 2, 4>}, {transform_indices = @transform_2, window_bounds = array<i64: 2>}, {transform_indices = @transform_3, window_bounds = array<i64: 2, 8, 128>}, {transform_indices = @transform_4, window_bounds = array<i64: 2, 8, 128>}, {transform_indices = @transform_5, window_bounds = array<i64: 2, 8, 128>}, {transform_indices = @transform_6, window_bounds = array<i64: 2, 8, 128>}]} {
    %c0_i32 = arith.constant 0 : i32
    %0 = arith.cmpi eq, %arg0, %c0_i32 : i32
    %1 = arith.extui %0 : i1 to i32
    %c0_i32_0 = arith.constant 0 : i32
    %2 = arith.cmpi ne, %1, %c0_i32_0 : i32
    scf.if %2 {
      %c0_i32_2 = arith.constant 0 : i32
      %6 = arith.cmpi eq, %arg1, %c0_i32_2 : i32
      %7 = arith.extui %6 : i1 to i32
      %c0_i32_3 = arith.constant 0 : i32
      %8 = arith.cmpi ne, %7, %c0_i32_3 : i32
      scf.if %8 {
        %cst_46 = arith.constant 0.000000e+00 : f32
        %102 = vector.broadcast %cst_46 : f32 to vector<1x1xf32>
        %c0_47 = arith.constant 0 : index
        %c0_48 = arith.constant 0 : index
        %103 = vector.load %arg10[%c0_47, %c0_48] : memref<1x1xf32, #tpu.memory_space<vmem>>, vector<1x1xf32>
        tpu.vector_store %arg10[%c0_47, %c0_48], %102 {strides = array<i32>} : memref<1x1xf32, #tpu.memory_space<vmem>>, vector<1x1xf32>,
      } else {
      }
      %c0 = arith.constant 0 : index
      %9 = memref.load %arg2[%c0] : memref<3xf32, #tpu.memory_space<smem>>
      %c0_4 = arith.constant 0 : index
      %c0_5 = arith.constant 0 : index
      %c0_6 = arith.constant 0 : index
      %10 = vector.load %arg5[%c0_4, %c0_5, %c0_6] : memref<2x8x128xf32, #tpu.memory_space<vmem>>, vector<1x8x128xf32>
      %11 = vector.shape_cast %10 : vector<1x8x128xf32> to vector<8x128xf32>
      %c1 = arith.constant 1 : index
      %c0_7 = arith.constant 0 : index
      %c0_8 = arith.constant 0 : index
      %12 = vector.load %arg5[%c1, %c0_7, %c0_8] : memref<2x8x128xf32, #tpu.memory_space<vmem>>, vector<1x8x128xf32>
      %13 = vector.shape_cast %12 : vector<1x8x128xf32> to vector<8x128xf32>
      %c0_9 = arith.constant 0 : index
      %c0_10 = arith.constant 0 : index
      %c0_11 = arith.constant 0 : index
      %14 = vector.load %arg6[%c0_9, %c0_10, %c0_11] : memref<2x8x128xf32, #tpu.memory_space<vmem>>, vector<1x8x128xf32>
      %15 = vector.shape_cast %14 : vector<1x8x128xf32> to vector<8x128xf32>
      %c1_12 = arith.constant 1 : index
      %c0_13 = arith.constant 0 : index
      %c0_14 = arith.constant 0 : index
      %16 = vector.load %arg6[%c1_12, %c0_13, %c0_14] : memref<2x8x128xf32, #tpu.memory_space<vmem>>, vector<1x8x128xf32>
      %17 = vector.shape_cast %16 : vector<1x8x128xf32> to vector<8x128xf32>
      %cst = arith.constant 0.000000e+00 : f32
      %18 = vector.broadcast %cst : f32 to vector<1x1xf32>
      %c0_15 = arith.constant 0 : index
      %19 = memref.load %arg4[%c0_15] : memref<2xf32, #tpu.memory_space<smem>>
      %20 = arith.mulf %9, %19 : f32
      %c0_16 = arith.constant 0 : index
      %c0_17 = arith.constant 0 : index
      %21 = memref.load %arg3[%c0_16, %c0_17] : memref<2x4xf32, #tpu.memory_space<smem>>
      %22 = arith.mulf %9, %21 : f32
      %23 = vector.broadcast %22 : f32 to vector<8x128xf32>
      %24 = arith.mulf %23, %11 : vector<8x128xf32>
      %25 = vector.broadcast %20 : f32 to vector<8x128xf32>
      %26 = arith.addf %25, %24 : vector<8x128xf32>
      %c0_18 = arith.constant 0 : index
      %c1_19 = arith.constant 1 : index
      %27 = memref.load %arg3[%c0_18, %c1_19] : memref<2x4xf32, #tpu.memory_space<smem>>
      %28 = arith.mulf %9, %27 : f32
      %29 = vector.broadcast %28 : f32 to vector<8x128xf32>
      %30 = arith.mulf %29, %13 : vector<8x128xf32>
      %31 = arith.addf %26, %30 : vector<8x128xf32>
      %c0_20 = arith.constant 0 : index
      %c2 = arith.constant 2 : index
      %32 = memref.load %arg3[%c0_20, %c2] : memref<2x4xf32, #tpu.memory_space<smem>>
      %33 = arith.mulf %9, %32 : f32
      %34 = vector.broadcast %33 : f32 to vector<8x128xf32>
      %35 = arith.mulf %34, %15 : vector<8x128xf32>
      %36 = arith.addf %31, %35 : vector<8x128xf32>
      %c0_21 = arith.constant 0 : index
      %c3 = arith.constant 3 : index
      %37 = memref.load %arg3[%c0_21, %c3] : memref<2x4xf32, #tpu.memory_space<smem>>
      %38 = arith.mulf %9, %37 : f32
      %39 = vector.broadcast %38 : f32 to vector<8x128xf32>
      %40 = arith.mulf %39, %17 : vector<8x128xf32>
      %41 = arith.addf %36, %40 : vector<8x128xf32>
      %42 = arith.negf %41 : vector<8x128xf32>
      %43 = math.exp %42 : vector<8x128xf32>
      %cst_22 = arith.constant 1.000000e+00 : f32
      %44 = vector.broadcast %cst_22 : f32 to vector<8x128xf32>
      %45 = arith.addf %44, %43 : vector<8x128xf32>
      %46 = arith.divf %44, %45 : vector<8x128xf32>
      %c2_i32 = arith.constant 2 : i32
      %47 = arith.muli %c2_i32, %arg1 : i32
      %c0_i32_23 = arith.constant 0 : i32
      %48 = arith.addi %47, %c0_i32_23 : i32
      %49 = arith.index_cast %48 : i32 to index
      %c0_24 = arith.constant 0 : index
      %c0_25 = arith.constant 0 : index
      %50 = vector.load %arg9[%49, %c0_24, %c0_25] : memref<4x8x128xf32, #tpu.memory_space<vmem>>, vector<1x8x128xf32>
      %51 = vector.shape_cast %50 : vector<1x8x128xf32> to vector<8x128xf32>
      %52 = vector.shape_cast %46 : vector<8x128xf32> to vector<1x8x128xf32>
      tpu.vector_store %arg9[%49, %c0_24, %c0_25], %52 {strides = array<i32>} : memref<4x8x128xf32, #tpu.memory_space<vmem>>, vector<1x8x128xf32>,
      %53 = vector.shape_cast %46 : vector<8x128xf32> to vector<1x8x128xf32>
      %cst_26 = arith.constant dense<0.000000e+00> : vector<1xf32>
      %54 = vector.multi_reduction <add>, %53, %cst_26 [1, 2] : vector<1x8x128xf32> to vector<1xf32>
      %55 = vector.shape_cast %54 : vector<1xf32> to vector<1x1x1xf32>
      %56 = vector.extract %55[0, 0, 0] : f32 from vector<1x1x1xf32>
      %57 = vector.broadcast %56 : f32 to vector<1x1xf32>
      %58 = arith.addf %18, %57 : vector<1x1xf32>
      %c1_27 = arith.constant 1 : index
      %59 = memref.load %arg4[%c1_27] : memref<2xf32, #tpu.memory_space<smem>>
      %60 = arith.mulf %9, %59 : f32
      %c1_28 = arith.constant 1 : index
      %c0_29 = arith.constant 0 : index
      %61 = memref.load %arg3[%c1_28, %c0_29] : memref<2x4xf32, #tpu.memory_space<smem>>
      %62 = arith.mulf %9, %61 : f32
      %63 = vector.broadcast %62 : f32 to vector<8x128xf32>
      %64 = arith.mulf %63, %11 : vector<8x128xf32>
      %65 = vector.broadcast %60 : f32 to vector<8x128xf32>
      %66 = arith.addf %65, %64 : vector<8x128xf32>
      %c1_30 = arith.constant 1 : index
      %c1_31 = arith.constant 1 : index
      %67 = memref.load %arg3[%c1_30, %c1_31] : memref<2x4xf32, #tpu.memory_space<smem>>
      %68 = arith.mulf %9, %67 : f32
      %69 = vector.broadcast %68 : f32 to vector<8x128xf32>
      %70 = arith.mulf %69, %13 : vector<8x128xf32>
      %71 = arith.addf %66, %70 : vector<8x128xf32>
      %c1_32 = arith.constant 1 : index
      %c2_33 = arith.constant 2 : index
      %72 = memref.load %arg3[%c1_32, %c2_33] : memref<2x4xf32, #tpu.memory_space<smem>>
      %73 = arith.mulf %9, %72 : f32
      %74 = vector.broadcast %73 : f32 to vector<8x128xf32>
      %75 = arith.mulf %74, %15 : vector<8x128xf32>
      %76 = arith.addf %71, %75 : vector<8x128xf32>
      %c1_34 = arith.constant 1 : index
      %c3_35 = arith.constant 3 : index
      %77 = memref.load %arg3[%c1_34, %c3_35] : memref<2x4xf32, #tpu.memory_space<smem>>
      %78 = arith.mulf %9, %77 : f32
      %79 = vector.broadcast %78 : f32 to vector<8x128xf32>
      %80 = arith.mulf %79, %17 : vector<8x128xf32>
      %81 = arith.addf %76, %80 : vector<8x128xf32>
      %82 = arith.negf %81 : vector<8x128xf32>
      %83 = math.exp %82 : vector<8x128xf32>
      %cst_36 = arith.constant 1.000000e+00 : f32
      %84 = vector.broadcast %cst_36 : f32 to vector<8x128xf32>
      %85 = arith.addf %84, %83 : vector<8x128xf32>
      %86 = arith.divf %84, %85 : vector<8x128xf32>
      %c2_i32_37 = arith.constant 2 : i32
      %87 = arith.muli %c2_i32_37, %arg1 : i32
      %c1_i32_38 = arith.constant 1 : i32
      %88 = arith.addi %87, %c1_i32_38 : i32
      %89 = arith.index_cast %88 : i32 to index
      %c0_39 = arith.constant 0 : index
      %c0_40 = arith.constant 0 : index
      %90 = vector.load %arg9[%89, %c0_39, %c0_40] : memref<4x8x128xf32, #tpu.memory_space<vmem>>, vector<1x8x128xf32>
      %91 = vector.shape_cast %90 : vector<1x8x128xf32> to vector<8x128xf32>
      %92 = vector.shape_cast %86 : vector<8x128xf32> to vector<1x8x128xf32>
      tpu.vector_store %arg9[%89, %c0_39, %c0_40], %92 {strides = array<i32>} : memref<4x8x128xf32, #tpu.memory_space<vmem>>, vector<1x8x128xf32>,
      %93 = vector.shape_cast %86 : vector<8x128xf32> to vector<1x8x128xf32>
      %cst_41 = arith.constant dense<0.000000e+00> : vector<1xf32>
      %94 = vector.multi_reduction <add>, %93, %cst_41 [1, 2] : vector<1x8x128xf32> to vector<1xf32>
      %95 = vector.shape_cast %94 : vector<1xf32> to vector<1x1x1xf32>
      %96 = vector.extract %95[0, 0, 0] : f32 from vector<1x1x1xf32>
      %97 = vector.broadcast %96 : f32 to vector<1x1xf32>
      %98 = arith.addf %58, %97 : vector<1x1xf32>
      %c0_42 = arith.constant 0 : index
      %c0_43 = arith.constant 0 : index
      %99 = vector.load %arg10[%c0_42, %c0_43] : memref<1x1xf32, #tpu.memory_space<vmem>>, vector<1x1xf32>
      %100 = arith.addf %99, %98 : vector<1x1xf32>
      %c0_44 = arith.constant 0 : index
      %c0_45 = arith.constant 0 : index
      %101 = vector.load %arg10[%c0_44, %c0_45] : memref<1x1xf32, #tpu.memory_space<vmem>>, vector<1x1xf32>
      tpu.vector_store %arg10[%c0_44, %c0_45], %100 {strides = array<i32>} : memref<1x1xf32, #tpu.memory_space<vmem>>, vector<1x1xf32>,
    } else {
    }
    %c1_i32 = arith.constant 1 : i32
    %3 = arith.cmpi eq, %arg0, %c1_i32 : i32
    %4 = arith.extui %3 : i1 to i32
    %c0_i32_1 = arith.constant 0 : i32
    %5 = arith.cmpi ne, %4, %c0_i32_1 : i32
    scf.if %5 {
      %c1 = arith.constant 1 : index
      %6 = memref.load %arg2[%c1] : memref<3xf32, #tpu.memory_space<smem>>
      %c2 = arith.constant 2 : index
      %7 = memref.load %arg2[%c2] : memref<3xf32, #tpu.memory_space<smem>>
      %c0 = arith.constant 0 : index
      %c0_2 = arith.constant 0 : index
      %8 = vector.load %arg10[%c0, %c0_2] : memref<1x1xf32, #tpu.memory_space<vmem>>, vector<1x1xf32>
      %cst = arith.constant 2.44140625E-4 : f32
      %9 = vector.broadcast %cst : f32 to vector<1x1xf32>
      %10 = arith.mulf %8, %9 : vector<1x1xf32>
      %11 = vector.broadcast %7 : f32 to vector<1x1xf32>
      %12 = arith.divf %11, %10 : vector<1x1xf32>
      %cst_3 = arith.constant 1.000000e+00 : f32
      %13 = arith.subf %cst_3, %7 : f32
      %cst_4 = arith.constant 1.000000e+00 : f32
      %14 = vector.broadcast %cst_4 : f32 to vector<1x1xf32>
      %15 = arith.subf %14, %10 : vector<1x1xf32>
      %16 = vector.broadcast %13 : f32 to vector<1x1xf32>
      %17 = arith.divf %16, %15 : vector<1x1xf32>
      %cst_5 = arith.constant 1.000000e+00 : f32
      %18 = vector.broadcast %cst_5 : f32 to vector<1x1xf32>
      %19 = arith.cmpf ole, %12, %18 : vector<1x1xf32>
      %20 = arith.select %19, %12, %17 : vector<1x1xi1>, vector<1x1xf32>
      %cst_6 = arith.constant 0.000000e+00 : f32
      %21 = vector.broadcast %cst_6 : f32 to vector<1x1xf32>
      %cst_7 = arith.constant 1.000000e+00 : f32
      %22 = vector.broadcast %cst_7 : f32 to vector<1x1xf32>
      %23 = arith.subf %22, %17 : vector<1x1xf32>
      %24 = arith.select %19, %21, %23 : vector<1x1xi1>, vector<1x1xf32>
      %c2_i32 = arith.constant 2 : i32
      %25 = arith.muli %c2_i32, %arg1 : i32
      %c0_i32_8 = arith.constant 0 : i32
      %26 = arith.addi %25, %c0_i32_8 : i32
      %27 = arith.index_cast %26 : i32 to index
      %c0_9 = arith.constant 0 : index
      %c0_10 = arith.constant 0 : index
      %28 = vector.load %arg9[%27, %c0_9, %c0_10] : memref<4x8x128xf32, #tpu.memory_space<vmem>>, vector<1x8x128xf32>
      %29 = vector.shape_cast %28 : vector<1x8x128xf32> to vector<8x128xf32>
      %30 = vector.broadcast %20 : vector<1x1xf32> to vector<8x128xf32>
      %31 = arith.mulf %30, %29 : vector<8x128xf32>
      %32 = vector.broadcast %24 : vector<1x1xf32> to vector<8x128xf32>
      %33 = arith.addf %31, %32 : vector<8x128xf32>
      %c0_11 = arith.constant 0 : index
      %c0_12 = arith.constant 0 : index
      %c0_13 = arith.constant 0 : index
      %34 = vector.load %arg7[%c0_11, %c0_12, %c0_13] : memref<2x8x128xf32, #tpu.memory_space<vmem>>, vector<1x8x128xf32>
      %35 = vector.shape_cast %34 : vector<1x8x128xf32> to vector<8x128xf32>
      %36 = arith.subf %33, %35 : vector<8x128xf32>
      %37 = vector.broadcast %6 : f32 to vector<8x128xf32>
      %38 = arith.mulf %37, %36 : vector<8x128xf32>
      %39 = arith.negf %38 : vector<8x128xf32>
      %40 = math.exp %39 : vector<8x128xf32>
      %cst_14 = arith.constant 1.000000e+00 : f32
      %41 = vector.broadcast %cst_14 : f32 to vector<8x128xf32>
      %42 = arith.addf %41, %40 : vector<8x128xf32>
      %43 = arith.divf %41, %42 : vector<8x128xf32>
      %c0_15 = arith.constant 0 : index
      %c0_16 = arith.constant 0 : index
      %c0_17 = arith.constant 0 : index
      %44 = vector.load %arg8[%c0_15, %c0_16, %c0_17] : memref<2x8x128xf32, #tpu.memory_space<vmem>>, vector<1x8x128xf32>
      %45 = vector.shape_cast %44 : vector<1x8x128xf32> to vector<8x128xf32>
      %46 = vector.shape_cast %43 : vector<8x128xf32> to vector<1x8x128xf32>
      tpu.vector_store %arg8[%c0_15, %c0_16, %c0_17], %46 {strides = array<i32>} : memref<2x8x128xf32, #tpu.memory_space<vmem>>, vector<1x8x128xf32>,
      %c2_i32_18 = arith.constant 2 : i32
      %47 = arith.muli %c2_i32_18, %arg1 : i32
      %c1_i32_19 = arith.constant 1 : i32
      %48 = arith.addi %47, %c1_i32_19 : i32
      %49 = arith.index_cast %48 : i32 to index
      %c0_20 = arith.constant 0 : index
      %c0_21 = arith.constant 0 : index
      %50 = vector.load %arg9[%49, %c0_20, %c0_21] : memref<4x8x128xf32, #tpu.memory_space<vmem>>, vector<1x8x128xf32>
      %51 = vector.shape_cast %50 : vector<1x8x128xf32> to vector<8x128xf32>
      %52 = vector.broadcast %20 : vector<1x1xf32> to vector<8x128xf32>
      %53 = arith.mulf %52, %51 : vector<8x128xf32>
      %54 = vector.broadcast %24 : vector<1x1xf32> to vector<8x128xf32>
      %55 = arith.addf %53, %54 : vector<8x128xf32>
      %c1_22 = arith.constant 1 : index
      %c0_23 = arith.constant 0 : index
      %c0_24 = arith.constant 0 : index
      %56 = vector.load %arg7[%c1_22, %c0_23, %c0_24] : memref<2x8x128xf32, #tpu.memory_space<vmem>>, vector<1x8x128xf32>
      %57 = vector.shape_cast %56 : vector<1x8x128xf32> to vector<8x128xf32>
      %58 = arith.subf %55, %57 : vector<8x128xf32>
      %59 = vector.broadcast %6 : f32 to vector<8x128xf32>
      %60 = arith.mulf %59, %58 : vector<8x128xf32>
      %61 = arith.negf %60 : vector<8x128xf32>
      %62 = math.exp %61 : vector<8x128xf32>
      %cst_25 = arith.constant 1.000000e+00 : f32
      %63 = vector.broadcast %cst_25 : f32 to vector<8x128xf32>
      %64 = arith.addf %63, %62 : vector<8x128xf32>
      %65 = arith.divf %63, %64 : vector<8x128xf32>
      %c1_26 = arith.constant 1 : index
      %c0_27 = arith.constant 0 : index
      %c0_28 = arith.constant 0 : index
      %66 = vector.load %arg8[%c1_26, %c0_27, %c0_28] : memref<2x8x128xf32, #tpu.memory_space<vmem>>, vector<1x8x128xf32>
      %67 = vector.shape_cast %66 : vector<1x8x128xf32> to vector<8x128xf32>
      %68 = vector.shape_cast %65 : vector<8x128xf32> to vector<1x8x128xf32>
      tpu.vector_store %arg8[%c1_26, %c0_27, %c0_28], %68 {strides = array<i32>} : memref<2x8x128xf32, #tpu.memory_space<vmem>>, vector<1x8x128xf32>,
    } else {
    }
    return
  }
  func.func @transform_0(%arg0: i32, %arg1: i32) -> i32 {
    %c0_i32 = arith.constant 0 : i32
    %c0_i32_0 = arith.constant 0 : i32
    return %c0_i32 : i32
  }
  func.func @transform_1(%arg0: i32, %arg1: i32) -> (i32, i32) {
    %c0_i32 = arith.constant 0 : i32
    %c0_i32_0 = arith.constant 0 : i32
    %c0_i32_1 = arith.constant 0 : i32
    return %c0_i32, %c0_i32_0 : i32, i32
  }
  func.func @transform_2(%arg0: i32, %arg1: i32) -> i32 {
    %c0_i32 = arith.constant 0 : i32
    %c0_i32_0 = arith.constant 0 : i32
    return %c0_i32 : i32
  }
  func.func @transform_3(%arg0: i32, %arg1: i32) -> (i32, i32, i32) {
    %c1_i32 = arith.constant 1 : i32
    %0 = arith.subi %c1_i32, %arg0 : i32
    %1 = arith.muli %arg1, %0 : i32
    %c1_i32_0 = arith.constant 1 : i32
    %2 = arith.muli %c1_i32_0, %arg0 : i32
    %3 = arith.addi %1, %2 : i32
    %c0_i32 = arith.constant 0 : i32
    %c0_i32_1 = arith.constant 0 : i32
    %c0_i32_2 = arith.constant 0 : i32
    return %c0_i32, %3, %c0_i32_1 : i32, i32, i32
  }
  func.func @transform_4(%arg0: i32, %arg1: i32) -> (i32, i32, i32) {
    %c1_i32 = arith.constant 1 : i32
    %0 = arith.subi %c1_i32, %arg0 : i32
    %1 = arith.muli %arg1, %0 : i32
    %c1_i32_0 = arith.constant 1 : i32
    %2 = arith.muli %c1_i32_0, %arg0 : i32
    %3 = arith.addi %1, %2 : i32
    %c0_i32 = arith.constant 0 : i32
    %c0_i32_1 = arith.constant 0 : i32
    %c0_i32_2 = arith.constant 0 : i32
    return %c0_i32, %3, %c0_i32_1 : i32, i32, i32
  }
  func.func @transform_5(%arg0: i32, %arg1: i32) -> (i32, i32, i32) {
    %0 = arith.muli %arg1, %arg0 : i32
    %c0_i32 = arith.constant 0 : i32
    %c0_i32_0 = arith.constant 0 : i32
    %c0_i32_1 = arith.constant 0 : i32
    return %c0_i32, %0, %c0_i32_0 : i32, i32, i32
  }
  func.func @transform_6(%arg0: i32, %arg1: i32) -> (i32, i32, i32) {
    %0 = arith.muli %arg1, %arg0 : i32
    %c0_i32 = arith.constant 0 : i32
    %c0_i32_0 = arith.constant 0 : i32
    %c0_i32_1 = arith.constant 0 : i32
    return %c0_i32, %0, %c0_i32_0 : i32, i32, i32
  }
}

</mosaic_0001>

<llo_original>
// kernel: memc_loupe_forward.1
$region0: #{memc_loupe_forward.1}
  #allocation0 [shape = 'u32[]', space=smem, size = 0x4, offset = 0x4, fixed_abs, tag = 'smem constant byte address 0x4 - core index']
  #allocation1 [shape = 'u32[144,128]{1,0:T(1,128)}', space=vmem, size = 0x12000, scoped, tag = 'internal scratch']
  #allocation2 [shape = 'f32[4,8,128]{2,1,0:T(8,128)}', space=vmem, size = 0x4000, scoped, tag = 'scratch operand']
  #allocation3 [shape = 'f32[1,1]{1,0:T(1,128)}', space=vmem, size = 0x200, scoped, tag = 'scratch operand']
  %s0 = inlined_call_operand.vmem [shape: f32[3], index: 0, kind: input, shape index: {}]
  %s1 = inlined_call_operand.vmem [shape: f32[2,4], index: 1, kind: input, shape index: {}]
  %s2 = inlined_call_operand.vmem [shape: f32[2], index: 2, kind: input, shape index: {}]
  %s3 = inlined_call_operand.vmem [shape: f32[2,16,128], index: 3, kind: input, shape index: {}]
  %s4 = inlined_call_operand.hbm [shape: f32[2,16,128], index: 4, kind: input, shape index: {}]
  %s5 = inlined_call_operand.hbm [shape: f32[2,16,128], index: 5, kind: input, shape index: {}]
  %s6 = inlined_call_operand.hbm [shape: f32[2,16,128], index: 6, kind: output, shape index: {}]
  %s7 = sld [smem:[#allocation0]]
  $region127: #{memc_loupe_forward.1} parent=0
    _
  %s9 = ssub.s32 1, %s7
  %s10 = scalar_select 0, %s9, %s7
  $region1: #{memc_loupe_forward.1} parent=0
    #allocation4 [shape = 'u8[512]{0}', space=smem, size = 0x200, scoped, tag = 'input window, operand 0, single buffered']
    #allocation5 [shape = 's32[2]{0}', space=sflag, size = 0x8, scoped, tag = 'scoped memory for memc_loupe_forward.1']
    #allocation6 [shape = 's32[2]{0}', space=sflag, size = 0x8, scoped, tag = 'scoped memory for memc_loupe_forward.1']
    #allocation7 [shape = 's32[2]{0}', space=sflag, size = 0x8, scoped, tag = 'scoped memory for memc_loupe_forward.1']
    #allocation8 [shape = 'u8[1024]{0}', space=smem, size = 0x400, scoped, tag = 'input window, operand 1, single buffered']
    #allocation9 [shape = 's32[1]{0}', space=sflag, size = 0x4, scoped, tag = 'scoped memory for memc_loupe_forward.1']
    #allocation10 [shape = 'u8[512]{0}', space=smem, size = 0x200, scoped, tag = 'input window, operand 2, single buffered']
    #allocation11 [shape = 'u8[16384]{0}', space=vmem, size = 0x4000, scoped, tag = 'input window, operand 3']
    #allocation12 [shape = 'u8[16384]{0}', space=vmem, size = 0x4000, scoped, tag = 'input window, operand 4']
    #allocation13 [shape = 'u8[16384]{0}', space=vmem, size = 0x4000, scoped, tag = 'input window, operand 5']
    #allocation14 [shape = 's32[2]{0}', space=sflag, size = 0x8, scoped, tag = 'scoped memory for memc_loupe_forward.1']
    #allocation15 [shape = 'u8[16384]{0}', space=vmem, size = 0x4000, scoped, tag = 'output window, operand 0']
    %11 = vsyncpa [#allocation7], 0
    %12 = vsyncpa [#allocation9], 0
    %13 = vsyncpa [#allocation5], 0
    %s14 = scalar_lea.sflag [#allocation5], 1
    %15 = vsyncpa %s14, 0
    %16 = vsyncpa [#allocation14], 0
    %s17 = scalar_lea.sflag [#allocation14], 1
    %18 = vsyncpa %s17, 0
    %19 = vsyncpa [#allocation6], 0
    %s20 = scalar_lea.sflag [#allocation6], 1
    %21 = vsyncpa %s20, 0
    loop: start=0, step=1, limit=6
    $region2: #{memc_loupe_forward.1} parent=1 // loop_pre_header
      _
    $region3: #{memc_loupe_forward.1} parent=1 // loop_header
      %s23 = sphi 0, %s27
      %p24 = scmp.ge.s32.totalorder %s23, 6
      %s30 = sphi 0, %s42
      %s31 = sphi 0, %s38
      %s32 = sphi 0, %s30
      %s33 = sphi 0, %s31
      %s34 = sphi 0, %s32
      %s35 = sphi 0, %s33
      %s43 = sphi 0, %s43
      %s45 = sphi 0, %s43
      %s46 = sphi 0, %s45
      %s60 = sphi 0, %s46
      %s64 = sphi 0, %s64
      %s66 = sphi 0, %s64
      %s67 = sphi 0, %s66
      %s81 = sphi 0, %s67
      %s85 = sphi 0, %s85
      %s87 = sphi 0, %s85
      %s88 = sphi 0, %s87
      %s102 = sphi 0, %s88
      %s114 = sphi 0, %s116
      %s117 = sphi 0, %s114
      %s118 = sphi 0, %s117
      %s134 = sphi 0, %s118
      %s146 = sphi 0, %s148
      %s149 = sphi 0, %s146
      %s150 = sphi 0, %s149
      %s166 = sphi 0, %s150
      %s174 = sphi 0, %s176
      %s177 = sphi 0, %s174
      %s178 = sphi 0, %s177
      %s194 = sphi 0, %s178
      %s202 = sphi 0, %s204
      %s205 = sphi 0, %s202
      %s206 = sphi 0, %s205
      %s222 = sphi 0, %s206
    $region4: #{memc_loupe_forward.1} parent=1 // loop_header_branch
      %26 = sbr.rel (%p24) target = $region8
    $region5: #{memc_loupe_forward.1} parent=1 // loop_body
      %s28 = ssub.s32 %s23, 1
      %s29 = ssub.s32 %s23, 2
      %s36 = sadd.s32 1, %s31
      %p37 = scmp.ge.s32.totalorder %s36, 2
      %s38 = scalar_select %p37, 0, %s36
      %s39 = sadd.s32 1, %s30
      %s40 = scalar_select %p37, %s39, %s30
      %p41 = scmp.ge.s32.totalorder %s40, 2
      %s42 = scalar_select %p41, 0, %s40
      %s44 = sadd.s32 %s43, 1
      %p47 = scmp.eq.s32.totalorder %s23, 3
      %p48 = scmp.ne.s32.totalorder %s43, %s45
      %p49 = scmp.eq.s32.totalorder %s23, 0
      %p50 = por %p48, %p49
      %p51 = scmp.ne.s32.totalorder %s43, %s45
      %p52 = scmp.eq.s32.totalorder %s28, 3
      %p53 = por %p51, %p52
      %p54 = scmp.ne.s32.totalorder %s45, %s46
      %p55 = scmp.eq.s32.totalorder %s28, 0
      %p56 = por %p54, %p55
      %p57 = scmp.ne.s32.totalorder %s45, %s46
      %p58 = scmp.eq.s32.totalorder %s29, 3
      %p59 = por %p57, %p58
      %p61 = scmp.ne.s32.totalorder %s46, %s60
      %p62 = scmp.eq.s32.totalorder %s29, 0
      %p63 = por %p61, %p62
      %s65 = sadd.s32 %s64, 1
      %p68 = scmp.eq.s32.totalorder %s23, 3
      %p69 = scmp.ne.s32.totalorder %s64, %s66
      %p70 = scmp.eq.s32.totalorder %s23, 0
      %p71 = por %p69, %p70
      %p72 = scmp.ne.s32.totalorder %s64, %s66
      %p73 = scmp.eq.s32.totalorder %s28, 3
      %p74 = por %p72, %p73
      %p75 = scmp.ne.s32.totalorder %s66, %s67
      %p76 = scmp.eq.s32.totalorder %s28, 0
      %p77 = por %p75, %p76
      %p78 = scmp.ne.s32.totalorder %s66, %s67
      %p79 = scmp.eq.s32.totalorder %s29, 3
      %p80 = por %p78, %p79
      %p82 = scmp.ne.s32.totalorder %s67, %s81
      %p83 = scmp.eq.s32.totalorder %s29, 0
      %p84 = por %p82, %p83
      %s86 = sadd.s32 %s85, 1
      %p89 = scmp.eq.s32.totalorder %s23, 3
      %p90 = scmp.ne.s32.totalorder %s85, %s87
      %p91 = scmp.eq.s32.totalorder %s23, 0
      %p92 = por %p90, %p91
      %p93 = scmp.ne.s32.totalorder %s85, %s87
      %p94 = scmp.eq.s32.totalorder %s28, 3
      %p95 = por %p93, %p94
      %p96 = scmp.ne.s32.totalorder %s87, %s88
      %p97 = scmp.eq.s32.totalorder %s28, 0
      %p98 = por %p96, %p97
      %p99 = scmp.ne.s32.totalorder %s87, %s88
      %p100 = scmp.eq.s32.totalorder %s29, 3
      %p101 = por %p99, %p100
      %p103 = scmp.ne.s32.totalorder %s88, %s102
      %p104 = scmp.eq.s32.totalorder %s29, 0
      %p105 = por %p103, %p104
      %s106 = ssub.s32 1, %s30
      %s107 = smul.u32 %s31, %s106
      %s108 = sadd.s32 %s107, %s30
      %s109 = ssub.s32 1, %s42
      %s110 = smul.u32 %s38, %s109
      %s111 = sadd.s32 %s110, %s42
      %s112 = ssub.s32 %s108, %s111
      %p113 = scmp.eq.s32.totalorder %s112, 0
      %s115 = sadd.s32 %s114, 1
      %s116 = scalar_select %p113, %s114, %s115
      %p119 = pneg %p113
      %p120 = scmp.eq.s32.totalorder %s23, 3
      %p121 = por %p119, %p120
      %p122 = scmp.ne.s32.totalorder %s114, %s117
      %p123 = scmp.eq.s32.totalorder %s23, 0
      %p124 = por %p122, %p123
      %p125 = scmp.ne.s32.totalorder %s114, %s117
      %p126 = scmp.eq.s32.totalorder %s28, 3
      %p127 = por %p125, %p126
      %p128 = scmp.ne.s32.totalorder %s117, %s118
      %p129 = scmp.eq.s32.totalorder %s28, 0
      %p130 = por %p128, %p129
      %p131 = scmp.ne.s32.totalorder %s117, %s118
      %p132 = scmp.eq.s32.totalorder %s29, 3
      %p133 = por %p131, %p132
      %p135 = scmp.ne.s32.totalorder %s118, %s134
      %p136 = scmp.eq.s32.totalorder %s29, 0
      %p137 = por %p135, %p136
      %s138 = ssub.s32 1, %s30
      %s139 = smul.u32 %s31, %s138
      %s140 = sadd.s32 %s139, %s30
      %s141 = ssub.s32 1, %s42
      %s142 = smul.u32 %s38, %s141
      %s143 = sadd.s32 %s142, %s42
      %s144 = ssub.s32 %s140, %s143
      %p145 = scmp.eq.s32.totalorder %s144, 0
      %s147 = sadd.s32 %s146, 1
      %s148 = scalar_select %p145, %s146, %s147
      %p151 = pneg %p145
      %p152 = scmp.eq.s32.totalorder %s23, 3
      %p153 = por %p151, %p152
      %p154 = scmp.ne.s32.totalorder %s146, %s149
      %p155 = scmp.eq.s32.totalorder %s23, 0
      %p156 = por %p154, %p155
      %p157 = scmp.ne.s32.totalorder %s146, %s149
      %p158 = scmp.eq.s32.totalorder %s28, 3
      %p159 = por %p157, %p158
      %p160 = scmp.ne.s32.totalorder %s149, %s150
      %p161 = scmp.eq.s32.totalorder %s28, 0
      %p162 = por %p160, %p161
      %p163 = scmp.ne.s32.totalorder %s149, %s150
      %p164 = scmp.eq.s32.totalorder %s29, 3
      %p165 = por %p163, %p164
      %p167 = scmp.ne.s32.totalorder %s150, %s166
      %p168 = scmp.eq.s32.totalorder %s29, 0
      %p169 = por %p167, %p168
      %s170 = smul.u32 %s31, %s30
      %s171 = smul.u32 %s38, %s42
      %s172 = ssub.s32 %s170, %s171
      %p173 = scmp.eq.s32.totalorder %s172, 0
      %s175 = sadd.s32 %s174, 1
      %s176 = scalar_select %p173, %s174, %s175
      %p179 = pneg %p173
      %p180 = scmp.eq.s32.totalorder %s23, 3
      %p181 = por %p179, %p180
      %p182 = scmp.ne.s32.totalorder %s174, %s177
      %p183 = scmp.eq.s32.totalorder %s23, 0
      %p184 = por %p182, %p183
      %p185 = scmp.ne.s32.totalorder %s174, %s177
      %p186 = scmp.eq.s32.totalorder %s28, 3
      %p187 = por %p185, %p186
      %p188 = scmp.ne.s32.totalorder %s177, %s178
      %p189 = scmp.eq.s32.totalorder %s28, 0
      %p190 = por %p188, %p189
      %p191 = scmp.ne.s32.totalorder %s177, %s178
      %p192 = scmp.eq.s32.totalorder %s29, 3
      %p193 = por %p191, %p192
      %p195 = scmp.ne.s32.totalorder %s178, %s194
      %p196 = scmp.eq.s32.totalorder %s29, 0
      %p197 = por %p195, %p196
      %s198 = smul.u32 %s31, %s30
      %s199 = smul.u32 %s38, %s42
      %s200 = ssub.s32 %s198, %s199
      %p201 = scmp.eq.s32.totalorder %s200, 0
      %s203 = sadd.s32 %s202, 1
      %s204 = scalar_select %p201, %s202, %s203
      %p207 = pneg %p201
      %p208 = scmp.eq.s32.totalorder %s23, 3
      %p209 = por %p207, %p208
      %p210 = scmp.ne.s32.totalorder %s202, %s205
      %p211 = scmp.eq.s32.totalorder %s23, 0
      %p212 = por %p210, %p211
      %p213 = scmp.ne.s32.totalorder %s202, %s205
      %p214 = scmp.eq.s32.totalorder %s28, 3
      %p215 = por %p213, %p214
      %p216 = scmp.ne.s32.totalorder %s205, %s206
      %p217 = scmp.eq.s32.totalorder %s28, 0
      %p218 = por %p216, %p217
      %p219 = scmp.ne.s32.totalorder %s205, %s206
      %p220 = scmp.eq.s32.totalorder %s29, 3
      %p221 = por %p219, %p220
      %p223 = scmp.ne.s32.totalorder %s206, %s222
      %p224 = scmp.eq.s32.totalorder %s29, 0
      %p225 = por %p223, %p224
      %p226 = scmp.le.s32.totalorder 1, %s23
      %p227 = scmp.lt.s32.totalorder %s23, 5
      %p228 = pnand %p226, %p227
      %p229 = pneg %p228
      // Predicated region
      $region9: #{memc_loupe_forward.1} parent=5 // pred_check
        _
      $region10: #{memc_loupe_forward.1} parent=5 // pred_check_branch
        %231 = sbr.rel (%p228) target = $region12
      $region11: #{memc_loupe_forward.1} parent=5 // pred_region
        %s232 = ssub.s32 %s23, 1
        // Predicated region
        $region13: #{memc_loupe_forward.1} parent=11 // pred_check
          %p233 = pneg %p56
        $region14: #{memc_loupe_forward.1} parent=11 // pred_check_branch
          %235 = sbr.rel (%p233) target = $region16
        $region15: #{memc_loupe_forward.1} parent=11 // pred_region
          %s237 = ssub.s32 16, 16
          %238 = vsyncadd [#allocation7], %s237
          %s240 = sshll.u32 %s0, 4
          %s241 = int_to_ptr.vmem [resolvable:$true] %s240
          %243 = dma.vmem_to_smem %s241, 16, [#allocation4], [#allocation7]
        $region16: #{memc_loupe_forward.1} parent=11 // pred_fallthru
          _
        // Predicated region
        $region17: #{memc_loupe_forward.1} parent=11 // pred_check
          %p244 = pneg %p77
        $region18: #{memc_loupe_forward.1} parent=11 // pred_check_branch
          %246 = sbr.rel (%p244) target = $region20
        $region19: #{memc_loupe_forward.1} parent=11 // pred_region
          %s248 = ssub.s32 32, 32
          %249 = vsyncadd [#allocation9], %s248
          %s251 = sshll.u32 %s1, 4
          %s252 = int_to_ptr.vmem [resolvable:$true] %s251
          %254 = dma.vmem_to_smem %s252, 32, [#allocation8], [#allocation9]
        $region20: #{memc_loupe_forward.1} parent=11 // pred_fallthru
          _
        // Predicated region
        $region21: #{memc_loupe_forward.1} parent=11 // pred_check
          %p255 = pneg %p98
        $region22: #{memc_loupe_forward.1} parent=11 // pred_check_branch
          %257 = sbr.rel (%p255) target = $region24
        $region23: #{memc_loupe_forward.1} parent=11 // pred_region
          %s259 = ssub.s32 16, 16
          %260 = vsyncadd [#allocation9], %s259
          %s262 = sshll.u32 %s2, 4
          %s263 = int_to_ptr.vmem [resolvable:$true] %s262
          %265 = dma.vmem_to_smem %s263, 16, [#allocation10], [#allocation9]
        $region24: #{memc_loupe_forward.1} parent=11 // pred_fallthru
          _
      $region12: #{memc_loupe_forward.1} parent=5 // pred_fallthru
        _
      %p266 = scmp.lt.s32.totalorder %s23, 4
      // Predicated region
      $region25: #{memc_loupe_forward.1} parent=5 // pred_check
        %p267 = pneg %p266
      $region26: #{memc_loupe_forward.1} parent=5 // pred_check_branch
        %269 = sbr.rel (%p267) target = $region28
      $region27: #{memc_loupe_forward.1} parent=5 // pred_region
        // Predicated region
        $region29: #{memc_loupe_forward.1} parent=27 // pred_check
          %p270 = pneg %p124
        $region30: #{memc_loupe_forward.1} parent=27 // pred_check_branch
          %272 = sbr.rel (%p270) target = $region32
        $region31: #{memc_loupe_forward.1} parent=27 // pred_region
          %s273 = sand.u32 %s114, 1
          %s274 = sand.u32 %s114, 1
          %s275 = smul.addr %s274, 16
          %s276 = scalar_lea.vmem [#allocation11], %s275
          %s277 = ssub.s32 1, %s30
          %s278 = smul.u32 %s31, %s277
          %s279 = sadd.s32 %s278, %s30
          %s280 = smul.addr %s279, 8
          %s281 = scalar_lea.vmem %s3, %s280
          // Predicated region
          $region33: #{memc_loupe_forward.1} parent=31 // pred_check
            _
          $region34: #{memc_loupe_forward.1} parent=31 // pred_check_branch
            %283 = sbr.rel (0) target = $region36
          $region35: #{memc_loupe_forward.1} parent=31 // pred_region
            // Predicated region
            $region37: #{memc_loupe_forward.1} parent=35 // pred_check
              _
            $region38: #{memc_loupe_forward.1} parent=35 // pred_check_branch
              %285 = sbr.rel (0) target = $region40
            $region39: #{memc_loupe_forward.1} parent=35 // pred_region
              // Predicated region
              $region52: #{memc_loupe_forward.1} parent=39 // pred_check
                _
              $region53: #{memc_loupe_forward.1} parent=39 // pred_check_branch
                %302 = sbr.rel (0) target = $region55
              $region54: #{memc_loupe_forward.1} parent=39 // pred_region
                loop: start=0, step=1, limit=1
                $region56: #{memc_loupe_forward.1} parent=54 // loop_pre_header
                  _
                $region57: #{memc_loupe_forward.1} parent=54 // loop_header
                  %s304 = sphi 0, %s308
                  %p305 = scmp.ge.s32.totalorder %s304, 1
                  %s309 = sphi %s281, %s281
                  %s310 = sphi %s276, %s276
                $region58: #{memc_loupe_forward.1} parent=54 // loop_header_branch
                  %307 = sbr.rel (%p305) target = $region62
                $region59: #{memc_loupe_forward.1} parent=54 // loop_body
                  %v311 = vld [vmem:[%s309] sm:$0xff]
                  %312 = vst [vmem:[%s310] sm:$0xff] %v311
                  %v313 = vld [vmem:[%s309 + $0x10] sm:$0xff]
                  %314 = vst [vmem:[%s310 + $0x8] sm:$0xff] %v313
                $region60: #{memc_loupe_forward.1} parent=54 // loop_footer
                  %s308 = sadd.s32 1, %s304
                $region61: #{memc_loupe_forward.1} parent=54 // loop_footer_branch
                  %303 = sbr.rel target = $region57
                $region62: #{memc_loupe_forward.1} parent=54 // loop_exit
                  _
              $region55: #{memc_loupe_forward.1} parent=39 // pred_fallthru
                _
              // Predicated region
              $region63: #{memc_loupe_forward.1} parent=39 // pred_check
                _
              $region64: #{memc_loupe_forward.1} parent=39 // pred_check_branch
                %316 = sbr.rel target = $region66
              $region65: #{memc_loupe_forward.1} parent=39 // pred_region
                _
              $region66: #{memc_loupe_forward.1} parent=39 // pred_fallthru
                _
            $region40: #{memc_loupe_forward.1} parent=35 // pred_fallthru
              _
            // Predicated region
            $region41: #{memc_loupe_forward.1} parent=35 // pred_check
              _
            $region42: #{memc_loupe_forward.1} parent=35 // pred_check_branch
              %287 = sbr.rel target = $region44
            $region43: #{memc_loupe_forward.1} parent=35 // pred_region
              loop: start=0, step=1, limit=1
              $region45: #{memc_loupe_forward.1} parent=43 // loop_pre_header
                _
              $region46: #{memc_loupe_forward.1} parent=43 // loop_header
                %s290 = sphi 0, %s294
                %p291 = scmp.ge.s32.totalorder %s290, 1
                %s295 = sphi %s281, %s281
                %s296 = sphi %s276, %s276
              $region47: #{memc_loupe_forward.1} parent=43 // loop_header_branch
                %293 = sbr.rel (%p291) target = $region51
              $region48: #{memc_loupe_forward.1} parent=43 // loop_body
                %v297 = vld [vmem:[%s295] sm:$0xff]
                %298 = vst [vmem:[%s296] sm:$0xff] %v297
                %v299 = vld [vmem:[%s295 + $0x10] sm:$0xff]
                %300 = vst [vmem:[%s296 + $0x8] sm:$0xff] %v299
              $region49: #{memc_loupe_forward.1} parent=43 // loop_footer
                %s294 = sadd.s32 1, %s290
              $region50: #{memc_loupe_forward.1} parent=43 // loop_footer_branch
                %289 = sbr.rel target = $region46
              $region51: #{memc_loupe_forward.1} parent=43 // loop_exit
                _
            $region44: #{memc_loupe_forward.1} parent=35 // pred_fallthru
              _
          $region36: #{memc_loupe_forward.1} parent=31 // pred_fallthru
            _
          %317 = vnop
        $region32: #{memc_loupe_forward.1} parent=27 // pred_fallthru
          _
        // Predicated region
        $region67: #{memc_loupe_forward.1} parent=27 // pred_check
          %p318 = pneg %p156
        $region68: #{memc_loupe_forward.1} parent=27 // pred_check_branch
          %320 = sbr.rel (%p318) target = $region70
        $region69: #{memc_loupe_forward.1} parent=27 // pred_region
          %s321 = sand.u32 %s146, 1
          %s322 = scalar_lea.sflag [#allocation5], %s321
          %s323 = sand.u32 %s146, 1
          %s324 = smul.addr %s323, 16
          %s325 = scalar_lea.vmem [#allocation12], %s324
          %s326 = ssub.s32 1, %s30
          %s327 = smul.u32 %s31, %s326
          %s328 = sadd.s32 %s327, %s30
          %s330 = ssub.s32 256, 256
          %331 = vsyncadd %s322, %s330
          %s332 = smul.addr %s328, 128
          %s333 = scalar_lea.hbm %s4, %s332
          %s334 = sshll.u32 %s325, 4
          %s335 = int_to_ptr.vmem [resolvable:$true] %s334
          %340 = dma.hbm_to_vmem [thread:$0]  %s333, 256, %s335, %s322, 256, 128, 8
        $region70: #{memc_loupe_forward.1} parent=27 // pred_fallthru
          _
        // Predicated region
        $region71: #{memc_loupe_forward.1} parent=27 // pred_check
          %p341 = pneg %p184
        $region72: #{memc_loupe_forward.1} parent=27 // pred_check_branch
          %343 = sbr.rel (%p341) target = $region74
        $region73: #{memc_loupe_forward.1} parent=27 // pred_region
          %s344 = sand.u32 %s174, 1
          %s345 = scalar_lea.sflag [#allocation14], %s344
          %s346 = sand.u32 %s174, 1
          %s347 = smul.addr %s346, 16
          %s348 = scalar_lea.vmem [#allocation13], %s347
          %s349 = smul.u32 %s31, %s30
          %s351 = ssub.s32 256, 256
          %352 = vsyncadd %s345, %s351
          %s353 = smul.addr %s349, 128
          %s354 = scalar_lea.hbm %s5, %s353
          %s355 = sshll.u32 %s348, 4
          %s356 = int_to_ptr.vmem [resolvable:$true] %s355
          %361 = dma.hbm_to_vmem [thread:$0]  %s354, 256, %s356, %s345, 256, 128, 8
        $region74: #{memc_loupe_forward.1} parent=27 // pred_fallthru
          _
      $region28: #{memc_loupe_forward.1} parent=5 // pred_fallthru
        _
      %p362 = scmp.le.s32.totalorder 1, %s23
      %p363 = scmp.lt.s32.totalorder %s23, 5
      %p364 = pnand %p362, %p363
      %p365 = pneg %p364
      // Predicated region
      $region75: #{memc_loupe_forward.1} parent=5 // pred_check
        _
      $region76: #{memc_loupe_forward.1} parent=5 // pred_check_branch
        %367 = sbr.rel (%p364) target = $region78
      $region77: #{memc_loupe_forward.1} parent=5 // pred_region
        %s368 = ssub.s32 %s23, 1
        // Predicated region
        $region79: #{memc_loupe_forward.1} parent=77 // pred_check
          %p369 = pneg %p56
        $region80: #{memc_loupe_forward.1} parent=77 // pred_check_branch
          %371 = sbr.rel (%p369) target = $region82
        $region81: #{memc_loupe_forward.1} parent=77 // pred_region
          %372 = dma.done [#allocation7], 16
        $region82: #{memc_loupe_forward.1} parent=77 // pred_fallthru
          _
        // Predicated region
        $region83: #{memc_loupe_forward.1} parent=77 // pred_check
          %p373 = pneg %p77
        $region84: #{memc_loupe_forward.1} parent=77 // pred_check_branch
          %375 = sbr.rel (%p373) target = $region86
        $region85: #{memc_loupe_forward.1} parent=77 // pred_region
          %376 = dma.done [#allocation9], 32
        $region86: #{memc_loupe_forward.1} parent=77 // pred_fallthru
          _
        // Predicated region
        $region87: #{memc_loupe_forward.1} parent=77 // pred_check
          %p377 = pneg %p98
        $region88: #{memc_loupe_forward.1} parent=77 // pred_check_branch
          %379 = sbr.rel (%p377) target = $region90
        $region89: #{memc_loupe_forward.1} parent=77 // pred_region
          %380 = dma.done [#allocation9], 16
        $region90: #{memc_loupe_forward.1} parent=77 // pred_fallthru
          _
        %s381 = sand.u32 %s117, 1
        %s382 = sand.u32 %s117, 1
        %s383 = smul.addr %s382, 16
        %s384 = scalar_lea.vmem [#allocation11], %s383
        // Predicated region
        $region91: #{memc_loupe_forward.1} parent=77 // pred_check
          %p385 = pneg %p130
        $region92: #{memc_loupe_forward.1} parent=77 // pred_check_branch
          %387 = sbr.rel (%p385) target = $region94
        $region93: #{memc_loupe_forward.1} parent=77 // pred_region
          _
        $region94: #{memc_loupe_forward.1} parent=77 // pred_fallthru
          _
        %s388 = sand.u32 %s149, 1
        %s389 = scalar_lea.sflag [#allocation5], %s388
        %s390 = sand.u32 %s149, 1
        %s391 = smul.addr %s390, 16
        %s392 = scalar_lea.vmem [#allocation12], %s391
        // Predicated region
        $region95: #{memc_loupe_forward.1} parent=77 // pred_check
          %p393 = pneg %p162
        $region96: #{memc_loupe_forward.1} parent=77 // pred_check_branch
          %395 = sbr.rel (%p393) target = $region98
        $region97: #{memc_loupe_forward.1} parent=77 // pred_region
          %396 = dma.done %s389, 256
        $region98: #{memc_loupe_forward.1} parent=77 // pred_fallthru
          _
        %s397 = sand.u32 %s177, 1
        %s398 = scalar_lea.sflag [#allocation14], %s397
        %s399 = sand.u32 %s177, 1
        %s400 = smul.addr %s399, 16
        %s401 = scalar_lea.vmem [#allocation13], %s400
        // Predicated region
        $region99: #{memc_loupe_forward.1} parent=77 // pred_check
          %p402 = pneg %p190
        $region100: #{memc_loupe_forward.1} parent=77 // pred_check_branch
          %404 = sbr.rel (%p402) target = $region102
        $region101: #{memc_loupe_forward.1} parent=77 // pred_region
          %405 = dma.done %s398, 256
        $region102: #{memc_loupe_forward.1} parent=77 // pred_fallthru
          _
        %406 = sfence
        %p407 = pneg %p56
        %p408 = pneg %p53
        %p409 = pneg %p77
        %p410 = pneg %p74
        %p411 = pneg %p98
        %p412 = pneg %p95
        %s413 = sand.u32 %s117, 1
        %s414 = sand.u32 %s117, 1
        %s415 = smul.addr %s414, 16
        %s416 = scalar_lea.vmem [#allocation11], %s415
        %p417 = pneg %p130
        %p418 = pneg %p127
        %s419 = sand.u32 %s149, 1
        %s420 = scalar_lea.sflag [#allocation5], %s419
        %s421 = sand.u32 %s149, 1
        %s422 = smul.addr %s421, 16
        %s423 = scalar_lea.vmem [#allocation12], %s422
        %p424 = pneg %p162
        %p425 = pneg %p159
        %s426 = sand.u32 %s177, 1
        %s427 = scalar_lea.sflag [#allocation14], %s426
        %s428 = sand.u32 %s177, 1
        %s429 = smul.addr %s428, 16
        %s430 = scalar_lea.vmem [#allocation13], %s429
        %p431 = pneg %p190
        %p432 = pneg %p187
        %p433 = pneg %p218
        %p434 = pneg %p215
        %s435 = sand.u32 %s205, 1
        %s436 = scalar_lea.sflag [#allocation6], %s435
        %s437 = sand.u32 %s205, 1
        %s438 = smul.addr %s437, 16
        %s439 = scalar_lea.vmem [#allocation15], %s438
        %s440 = ssub.s32 1, %s32
        %s441 = smul.u32 %s33, %s440
        %s442 = sadd.s32 %s441, %s32
        %s443 = ssub.s32 1, %s32
        %s444 = smul.u32 %s33, %s443
        %s445 = sadd.s32 %s444, %s32
        %s446 = smul.u32 %s33, %s32
        %s447 = smul.u32 %s33, %s32
        %p448 = scmp.eq.s32.totalorder %s32, 0
        // Predicated region
        $region103: #{memc_loupe_forward.1} parent=77 // pred_check
          %p449 = pneg %p448
        $region104: #{memc_loupe_forward.1} parent=77 // pred_check_branch
          %451 = sbr.rel (%p449) target = $region106
        $region105: #{memc_loupe_forward.1} parent=77 // pred_region
          %p452 = scmp.eq.s32.totalorder %s33, 0
          // Predicated region
          $region107: #{memc_loupe_forward.1} parent=105 // pred_check
            %p453 = pneg %p452
          $region108: #{memc_loupe_forward.1} parent=105 // pred_check_branch
            %455 = sbr.rel (%p453) target = $region110
          $region109: #{memc_loupe_forward.1} parent=105 // pred_region
            %vm456 = vcmask 0
            %457 = vst.msk [vmem:[#allocation3] sm:$0x1] %vm456, 0.0
          $region110: #{memc_loupe_forward.1} parent=105 // pred_fallthru
            _
          %s458 = sld [smem:[#allocation4]]
          %v459 = vld [vmem:[%s384] sm:$0xff]
          %s460 = scalar_lea.vmem %s384, 8 [#allocation11]
          %v461 = vld [vmem:[%s460] sm:$0xff]
          %v462 = vld [vmem:[%s392] sm:$0xff]
          %s463 = scalar_lea.vmem %s392, 8 [#allocation12]
          %v464 = vld [vmem:[%s463] sm:$0xff]
          %s465 = sld [smem:[#allocation10]]
          %s466 = smul.f32 %s458, %s465
          %s467 = sld [smem:[#allocation8]]
          %s468 = smul.f32 %s458, %s467
          %v469 = vstv %s468
          %v470 = vmul.f32 %v469, %v459
          %v471 = vstv %s466
          %v472 = vadd.f32 %v471, %v470
          %s473 = sld [smem:[#allocation8 + $0x1]]
          %s474 = smul.f32 %s458, %s473
          %v475 = vstv %s474
          %v476 = vmul.f32 %v475, %v461
          %v477 = vadd.f32 %v472, %v476
          %s478 = sld [smem:[#allocation8 + $0x2]]
          %s479 = smul.f32 %s458, %s478
          %v480 = vstv %s479
          %v481 = vmul.f32 %v480, %v462
          %v482 = vadd.f32 %v477, %v481
          %s483 = sld [smem:[#allocation8 + $0x3]]
          %s484 = smul.f32 %s458, %s483
          %v485 = vstv %s484
          %v486 = vmul.f32 %v485, %v464
          %v487 = vadd.f32 %v482, %v486
          %v488 = vxor.u32 %v487, 2147483648
          %v489 = vmul.f32 %v488, 1.442695
          %v490 = vpow.pop %v489
          %v491 = vadd.f32 %v490, 1.0
          %v492 = vrcp.pop %v491
          %v493 = vmul.f32 1.0, %v492
          %s494 = smul.u32 %s33, 2
          %s495 = smul.u32 %s494, 8
          %s496 = scalar_lea.vmem [#allocation2], %s495
          %497 = vst [vmem:[%s496] sm:$0xff] %v493
          %498 = vadd.xlane.f32.xlu0 %v493
          %v499 = vpop.xlane.xlu0 %498
          %v500 = vrot.slane %v499, 4
          %v501 = vadd.f32 %v499, %v500
          %v502 = vrot.slane %v501, 2
          %v503 = vadd.f32 %v501, %v502
          %v504 = vrot.slane %v503, 1
          %v505 = vadd.f32 %v503, %v504
          %s506 = vtos %v505
          %v507 = vstv %s506
          %v508 = vadd.f32 %v507, 0.0
          %s509 = sld [smem:[#allocation10 + $0x1]]
          %s510 = smul.f32 %s458, %s509
          %s511 = sld [smem:[#allocation8 + $0x80]]
          %s512 = smul.f32 %s458, %s511
          %v513 = vstv %s512
          %v514 = vmul.f32 %v513, %v459
          %v515 = vstv %s510
          %v516 = vadd.f32 %v515, %v514
          %s517 = sld [smem:[#allocation8 + $0x81]]
          %s518 = smul.f32 %s458, %s517
          %v519 = vstv %s518
          %v520 = vmul.f32 %v519, %v461
          %v521 = vadd.f32 %v516, %v520
          %s522 = sld [smem:[#allocation8 + $0x82]]
          %s523 = smul.f32 %s458, %s522
          %v524 = vstv %s523
          %v525 = vmul.f32 %v524, %v462
          %v526 = vadd.f32 %v521, %v525
          %s527 = sld [smem:[#allocation8 + $0x83]]
          %s528 = smul.f32 %s458, %s527
          %v529 = vstv %s528
          %v530 = vmul.f32 %v529, %v464
          %v531 = vadd.f32 %v526, %v530
          %v532 = vxor.u32 %v531, 2147483648
          %v533 = vmul.f32 %v532, 1.442695
          %v534 = vpow.pop %v533
          %v535 = vadd.f32 %v534, 1.0
          %v536 = vrcp.pop %v535
          %v537 = vmul.f32 1.0, %v536
          %s538 = sadd.s32 %s494, 1
          %s539 = smul.u32 %s538, 8
          %s540 = scalar_lea.vmem [#allocation2], %s539
          %541 = vst [vmem:[%s540] sm:$0xff] %v537
          %542 = vadd.xlane.f32.xlu0 %v537
          %v543 = vpop.xlane.xlu0 %542
          %v544 = vrot.slane %v543, 4
          %v545 = vadd.f32 %v543, %v544
          %v546 = vrot.slane %v545, 2
          %v547 = vadd.f32 %v545, %v546
          %v548 = vrot.slane %v547, 1
          %v549 = vadd.f32 %v547, %v548
          %s550 = vtos %v549
          %v551 = vstv %s550
          %v552 = vadd.f32 %v508, %v551
          %v553 = vld [vmem:[#allocation3] sm:$0x1]
          %v554 = vadd.f32 %v553, %v552
          %vm555 = vcmask 0
          %556 = vst.msk [vmem:[#allocation3] sm:$0x1] %vm555, %v554
        $region106: #{memc_loupe_forward.1} parent=77 // pred_fallthru
          _
        %p557 = scmp.eq.s32.totalorder %s32, 1
        // Predicated region
        $region111: #{memc_loupe_forward.1} parent=77 // pred_check
          %p558 = pneg %p557
        $region112: #{memc_loupe_forward.1} parent=77 // pred_check_branch
          %560 = sbr.rel (%p558) target = $region114
        $region113: #{memc_loupe_forward.1} parent=77 // pred_region
          %s561 = sld [smem:[#allocation4 + $0x1]]
          %s562 = sld [smem:[#allocation4 + $0x2]]
          %v563 = vld [vmem:[#allocation3] sm:$0x1]
          %v564 = vmul.f32 %v563, 0.00024414063
          %v565 = vstv %s562
          %v566 = vrcp.pop %v564
          %v567 = vmul.f32 %v565, %v566
          %s568 = ssub.f32 1.0, %s562
          %v569 = vsub.f32 1.0, %v564
          %v570 = vstv %s568
          %v571 = vrcp.pop %v569
          %v572 = vmul.f32 %v570, %v571
          %vm573 = vcmp.le.f32.partialorder %v567, 1.0
          %v574 = vsel %vm573, %v567, %v572
          %v575 = vsub.f32 1.0, %v572
          %v576 = vsel %vm573, 0.0, %v575
          %s577 = smul.u32 %s33, 2
          %s578 = smul.u32 %s577, 8
          %s579 = scalar_lea.vmem [#allocation2], %s578
          %v580 = vld [vmem:[%s579] sm:$0xff]
          %v582 = vlaneseq
          %v583 = vshrl.u32 %v582, 7
          %v584 = vsub.s32 0, %v583
          %v585 = vrot.slane %v574, %v584
          %586 = vset.pattern.permute.xlu0 0
          %587 = vperm.xlu0 %586, %v585
          %v588 = vpop.permute.xlu0 %587
          %v590 = vmul.f32 %v588, %v580
          %v592 = vlaneseq
          %v593 = vshrl.u32 %v592, 7
          %v594 = vsub.s32 0, %v593
          %v595 = vrot.slane %v576, %v594
          %596 = vset.pattern.permute.xlu0 0
          %597 = vperm.xlu0 %596, %v595
          %v598 = vpop.permute.xlu0 %597
          %v600 = vadd.f32 %v590, %v598
          %v601 = vld [vmem:[%s401] sm:$0xff]
          %v602 = vsub.f32 %v600, %v601
          %v603 = vstv %s561
          %v604 = vmul.f32 %v603, %v602
          %v605 = vxor.u32 %v604, 2147483648
          %v606 = vmul.f32 %v605, 1.442695
          %v607 = vpow.pop %v606
          %v608 = vadd.f32 %v607, 1.0
          %v609 = vrcp.pop %v608
          %v610 = vmul.f32 1.0, %v609
          %611 = vst [vmem:[%s439] sm:$0xff] %v610
          %s612 = sadd.s32 %s577, 1
          %s613 = smul.u32 %s612, 8
          %s614 = scalar_lea.vmem [#allocation2], %s613
          %v615 = vld [vmem:[%s614] sm:$0xff]
          %v616 = vmul.f32 %v588, %v615
          %v617 = vadd.f32 %v616, %v598
          %s618 = scalar_lea.vmem %s401, 8 [#allocation13]
          %v619 = vld [vmem:[%s618] sm:$0xff]
          %v620 = vsub.f32 %v617, %v619
          %v621 = vmul.f32 %v603, %v620
          %v622 = vxor.u32 %v621, 2147483648
          %v623 = vmul.f32 %v622, 1.442695
          %v624 = vpow.pop %v623
          %v625 = vadd.f32 %v624, 1.0
          %v626 = vrcp.pop %v625
          %v627 = vmul.f32 1.0, %v626
          %s628 = scalar_lea.vmem %s439, 8 [#allocation15]
          %629 = vst [vmem:[%s628] sm:$0xff] %v627
        $region114: #{memc_loupe_forward.1} parent=77 // pred_fallthru
          _
        %s630 = sand.u32 %s205, 1
        %s631 = scalar_lea.sflag [#allocation6], %s630
        %s632 = sand.u32 %s205, 1
        %s633 = smul.addr %s632, 16
        %s634 = scalar_lea.vmem [#allocation15], %s633
        // Predicated region
        $region115: #{memc_loupe_forward.1} parent=77 // pred_check
          %p635 = pneg %p215
        $region116: #{memc_loupe_forward.1} parent=77 // pred_check_branch
          %637 = sbr.rel (%p635) target = $region118
        $region117: #{memc_loupe_forward.1} parent=77 // pred_region
          %s638 = smul.u32 %s33, %s32
          %s640 = ssub.s32 256, 256
          %641 = vsyncadd %s631, %s640
          %s642 = smul.addr %s638, 128
          %s643 = scalar_lea.hbm %s6, %s642
          %s644 = sshll.u32 %s634, 4
          %s645 = int_to_ptr.vmem [resolvable:$true] %s644
          %650 = dma.vmem_to_hbm [thread:$0]  %s645, 256, %s643, %s631, 128, 256, 8
        $region118: #{memc_loupe_forward.1} parent=77 // pred_fallthru
          _
      $region78: #{memc_loupe_forward.1} parent=5 // pred_fallthru
        _
      %p651 = scmp.le.s32.totalorder 2, %s23
      // Predicated region
      $region119: #{memc_loupe_forward.1} parent=5 // pred_check
        %p652 = pneg %p651
      $region120: #{memc_loupe_forward.1} parent=5 // pred_check_branch
        %654 = sbr.rel (%p652) target = $region122
      $region121: #{memc_loupe_forward.1} parent=5 // pred_region
        %s655 = ssub.s32 %s23, 2
        // Predicated region
        $region123: #{memc_loupe_forward.1} parent=121 // pred_check
          %p656 = pneg %p221
        $region124: #{memc_loupe_forward.1} parent=121 // pred_check_branch
          %658 = sbr.rel (%p656) target = $region126
        $region125: #{memc_loupe_forward.1} parent=121 // pred_region
          %s659 = sand.u32 %s206, 1
          %s660 = scalar_lea.sflag [#allocation6], %s659
          %s661 = sand.u32 %s206, 1
          %s662 = smul.addr %s661, 16
          %s663 = scalar_lea.vmem [#allocation15], %s662
          %664 = dma.done %s660, 256
        $region126: #{memc_loupe_forward.1} parent=121 // pred_fallthru
          _
      $region122: #{memc_loupe_forward.1} parent=5 // pred_fallthru
        _
    $region6: #{memc_loupe_forward.1} parent=1 // loop_footer
      %s27 = sadd.s32 1, %s23
    $region7: #{memc_loupe_forward.1} parent=1 // loop_footer_branch
      %22 = sbr.rel target = $region3
    $region8: #{memc_loupe_forward.1} parent=1 // loop_exit
      _
    %665 = vsyncpa [#allocation5], 1
    %s666 = scalar_lea.sflag [#allocation5], 1
    %667 = vsyncpa %s666, 1
    %668 = vsyncpa [#allocation14], 1
    %s669 = scalar_lea.sflag [#allocation14], 1
    %670 = vsyncpa %s669, 1
    %671 = vsyncpa [#allocation6], 1
    %s672 = scalar_lea.sflag [#allocation6], 1
    %673 = vsyncpa %s672, 1
    %674 = vsyncpa [#allocation7], 1
    %s675 = scalar_lea.sflag [#allocation7], 1
    %676 = vsyncpa %s675, 1
    %677 = vsyncpa [#allocation9], 1

</llo_original>
